<compile_context>
chip_gen: v7x
topology: tpu7x:2x2x1
jax: 0.10.0
libtpu: 0.0.40
codegen_flags: <defaults>
</compile_context>

<pallas_src>
import functools

import jax
import jax.numpy as jnp
from jax.experimental import pallas as pl
from jax.experimental.pallas import tpu as pltpu

D_IN, D_H1, D_H2, D_H3, D_OUT = 27, 128, 64, 32, 7


def _mlp_kernel(x_ref,
                w1_ref, b1_ref,
                w2_ref, b2_ref,
                w3_ref, b3_ref,
                w4_ref, b4_ref,
                o_ref):
    # x cast to bf16 for the MXU; weights arrive already bf16; accumulate in f32;
    # bias add + ReLU stay in f32.
    x = x_ref[...].astype(jnp.bfloat16)

    # layer1: Linear(27, 128) + ReLU   (Dropout = identity at inference)
    h1 = jnp.dot(x, w1_ref[...],
                 preferred_element_type=jnp.float32) + b1_ref[...]
    h1 = jnp.maximum(h1, 0.0)

    # layer2: Linear(128, 64) + ReLU
    h2 = jnp.dot(h1.astype(jnp.bfloat16), w2_ref[...],
                 preferred_element_type=jnp.float32) + b2_ref[...]
    h2 = jnp.maximum(h2, 0.0)

    # layer3: Linear(64, 32) + ReLU
    h3 = jnp.dot(h2.astype(jnp.bfloat16), w3_ref[...],
                 preferred_element_type=jnp.float32) + b3_ref[...]
    h3 = jnp.maximum(h3, 0.0)

    # layer4: Linear(32, 7)  (no activation)
    out = jnp.dot(h3.astype(jnp.bfloat16), w4_ref[...],
                  preferred_element_type=jnp.float32) + b4_ref[...]

    o_ref[...] = out.astype(o_ref.dtype)


def _round_up(n, m):
    return ((n + m - 1) // m) * m


@functools.partial(jax.jit, static_argnames=("tile_b",))
def classifier_forward(x, params, *, tile_b=None):
    """x: [B, 27] float32. params: dict of f32 weights/biases. Returns [B, 7] float32."""
    B = x.shape[0]
    if tile_b is None:
        # Big enough to amortize per-grid-step overhead; VMEM per tile (double-buffered
        # x/out + f32/bf16 intermediates) stays a few MiB at 2048 rows.
        tile_b = min(2048, _round_up(B, 8))
    grid = (pl.cdiv(B, tile_b),)

    # One-time bf16 cast of the weights (tiny, ~30 KiB total); biases stay f32.
    w1 = params["w1"].astype(jnp.bfloat16)
    w2 = params["w2"].astype(jnp.bfloat16)
    w3 = params["w3"].astype(jnp.bfloat16)
    w4 = params["w4"].astype(jnp.bfloat16)

    # x / out streamed over the batch grid; weights & biases resident (constant maps).
    in_specs = [
        pl.BlockSpec((tile_b, D_IN), lambda i: (i, 0)),      # x
        pl.BlockSpec((D_IN, D_H1),   lambda i: (0, 0)),      # w1
        pl.BlockSpec((1, D_H1),      lambda i: (0, 0)),      # b1
        pl.BlockSpec((D_H1, D_H2),   lambda i: (0, 0)),      # w2
        pl.BlockSpec((1, D_H2),      lambda i: (0, 0)),      # b2
        pl.BlockSpec((D_H2, D_H3),   lambda i: (0, 0)),      # w3
        pl.BlockSpec((1, D_H3),      lambda i: (0, 0)),      # b3
        pl.BlockSpec((D_H3, D_OUT),  lambda i: (0, 0)),      # w4
        pl.BlockSpec((1, D_OUT),     lambda i: (0, 0)),      # b4
    ]
    out_spec = pl.BlockSpec((tile_b, D_OUT), lambda i: (i, 0))

    flops = 2 * B * (D_IN * D_H1 + D_H1 * D_H2 + D_H2 * D_H3 + D_H3 * D_OUT)
    weight_bytes = (2 * (D_IN * D_H1 + D_H1 * D_H2 + D_H2 * D_H3 + D_H3 * D_OUT)
                    + 4 * (D_H1 + D_H2 + D_H3 + D_OUT))
    bytes_accessed = B * (D_IN + D_OUT) * 4 + weight_bytes

    return pl.pallas_call(
        _mlp_kernel,
        out_shape=jax.ShapeDtypeStruct((B, D_OUT), jnp.float32),
        grid=grid,
        in_specs=in_specs,
        out_specs=out_spec,
        compiler_params=pltpu.CompilerParams(
            dimension_semantics=("parallel",)),   # batch axis -> 2 TCs on v7x
        cost_estimate=pl.CostEstimate(
            flops=flops, transcendentals=0, bytes_accessed=bytes_accessed),
    )(
        x,
        w1, params["b1"],
        w2, params["b2"],
        w3, params["b3"],
        w4, params["b4"],
    )


def init_params(key):
    """Deterministic init mimicking PyTorch nn.Linear default:
    U(-1/sqrt(fan_in), 1/sqrt(fan_in)) for both weights and biases.
    Weights stored as [in, out] (transposed vs. PyTorch's [out, in]) so the
    kernel computes x @ W + b == x @ W_pt.T + b."""
    dims = [(D_IN, D_H1), (D_H1, D_H2), (D_H2, D_H3), (D_H3, D_OUT)]
    params = {}
    for i, (fan_in, fan_out) in enumerate(dims, start=1):
        key, kw, kb = jax.random.split(key, 3)
        bound = 1.0 / jnp.sqrt(float(fan_in))
        params[f"w{i}"] = jax.random.uniform(
            kw, (fan_in, fan_out), jnp.float32, minval=-bound, maxval=bound)
        # bias kept 2D [1, fan_out] so it broadcasts cleanly on the lane axis
        params[f"b{i}"] = jax.random.uniform(
            kb, (1, fan_out), jnp.float32, minval=-bound, maxval=bound)
    return params


def _reference_forward(x, params):
    """Pure-JAX reference using the same bf16-operand / f32-accumulate recipe."""
    bf = jnp.bfloat16

    def lin(h, w, b):
        return jnp.dot(h.astype(bf), w.astype(bf),
                       preferred_element_type=jnp.float32) + b

    h = jnp.maximum(lin(x, params["w1"], params["b1"]), 0.0)
    h = jnp.maximum(lin(h, params["w2"], params["b2"]), 0.0)
    h = jnp.maximum(lin(h, params["w3"], params["b3"]), 0.0)
    return lin(h, params["w4"], params["b4"])


if __name__ == "__main__":
    key = jax.random.PRNGKey(0)
    key, kx = jax.random.split(key)

    B = 8
    x = jax.random.normal(kx, (B, D_IN), dtype=jnp.float32)
    params = init_params(key)

    out = classifier_forward(x, params)
    out = jax.block_until_ready(out)

    ref = _reference_forward(x, params)
    assert out.shape == (B, D_OUT), out.shape
    assert jnp.allclose(out, ref, atol=1e-3, rtol=1e-3), "mismatch vs JAX reference"

    print("KERNEL_OK")
</pallas_src>

<mosaic_0001>
module attributes {stable_mosaic.version = 11 : i64} {
  func.func @_mlp_kernel(%arg0: i32, %arg1: memref<8x27xf32, #tpu.memory_space<vmem>>, %arg2: memref<27x128xbf16, #tpu.memory_space<vmem>>, %arg3: memref<1x128xf32, #tpu.memory_space<vmem>>, %arg4: memref<128x64xbf16, #tpu.memory_space<vmem>>, %arg5: memref<1x64xf32, #tpu.memory_space<vmem>>, %arg6: memref<64x32xbf16, #tpu.memory_space<vmem>>, %arg7: memref<1x32xf32, #tpu.memory_space<vmem>>, %arg8: memref<32x7xbf16, #tpu.memory_space<vmem>>, %arg9: memref<1x7xf32, #tpu.memory_space<vmem>>, %arg10: memref<8x7xf32, #tpu.memory_space<vmem>>) attributes {dimension_semantics = [#tpu.dimension_semantics<parallel>], iteration_bounds = array<i64: 1>, scalar_prefetch = 0 : i64, scratch_operands = 0 : i64, tpu.core_type = #tpu.core_type<tc>, window_params = [{transform_indices = @transform_0, window_bounds = array<i64: 8, 27>}, {pipeline_mode = #tpu.pipeline_mode<synchronous>, transform_indices = @transform_1, window_bounds = array<i64: 27, 128>}, {pipeline_mode = #tpu.pipeline_mode<synchronous>, transform_indices = @transform_2, window_bounds = array<i64: 1, 128>}, {pipeline_mode = #tpu.pipeline_mode<synchronous>, transform_indices = @transform_3, window_bounds = array<i64: 128, 64>}, {pipeline_mode = #tpu.pipeline_mode<synchronous>, transform_indices = @transform_4, window_bounds = array<i64: 1, 64>}, {pipeline_mode = #tpu.pipeline_mode<synchronous>, transform_indices = @transform_5, window_bounds = array<i64: 64, 32>}, {pipeline_mode = #tpu.pipeline_mode<synchronous>, transform_indices = @transform_6, window_bounds = array<i64: 1, 32>}, {pipeline_mode = #tpu.pipeline_mode<synchronous>, transform_indices = @transform_7, window_bounds = array<i64: 32, 7>}, {pipeline_mode = #tpu.pipeline_mode<synchronous>, transform_indices = @transform_8, window_bounds = array<i64: 1, 7>}, {transform_indices = @transform_9, window_bounds = array<i64: 8, 7>}]} {
    %c0 = arith.constant 0 : index
    %c0_0 = arith.constant 0 : index
    %0 = vector.load %arg1[%c0, %c0_0] : memref<8x27xf32, #tpu.memory_space<vmem>>, vector<8x27xf32>
    %1 = arith.truncf %0 : vector<8x27xf32> to vector<8x27xbf16>
    %c0_1 = arith.constant 0 : index
    %c0_2 = arith.constant 0 : index
    %2 = vector.load %arg2[%c0_1, %c0_2] : memref<27x128xbf16, #tpu.memory_space<vmem>>, vector<27x128xbf16>
    %cst = arith.constant dense<0.000000e+00> : vector<8x128xf32>
    %3 = tpu.matmul %1, %2, %cst {dimension_numbers = #tpu.dot_dimension_numbers<[1], [0], [0], [1], [0, 0, 1, 1], [], []>} : vector<8x27xbf16>, vector<27x128xbf16>, vector<8x128xf32> -> vector<8x128xf32>
    %c0_3 = arith.constant 0 : index
    %c0_4 = arith.constant 0 : index
    %4 = vector.load %arg3[%c0_3, %c0_4] : memref<1x128xf32, #tpu.memory_space<vmem>>, vector<1x128xf32>
    %5 = vector.broadcast %4 : vector<1x128xf32> to vector<8x128xf32>
    %6 = arith.addf %3, %5 : vector<8x128xf32>
    %cst_5 = arith.constant 0.000000e+00 : f32
    %7 = vector.broadcast %cst_5 : f32 to vector<8x128xf32>
    %8 = arith.maximumf %6, %7 : vector<8x128xf32>
    %9 = arith.truncf %8 : vector<8x128xf32> to vector<8x128xbf16>
    %c0_6 = arith.constant 0 : index
    %c0_7 = arith.constant 0 : index
    %10 = vector.load %arg4[%c0_6, %c0_7] : memref<128x64xbf16, #tpu.memory_space<vmem>>, vector<128x64xbf16>
    %cst_8 = arith.constant dense<0.000000e+00> : vector<8x64xf32>
    %11 = tpu.matmul %9, %10, %cst_8 {dimension_numbers = #tpu.dot_dimension_numbers<[1], [0], [0], [1], [0, 0, 1, 1], [], []>} : vector<8x128xbf16>, vector<128x64xbf16>, vector<8x64xf32> -> vector<8x64xf32>
    %c0_9 = arith.constant 0 : index
    %c0_10 = arith.constant 0 : index
    %12 = vector.load %arg5[%c0_9, %c0_10] : memref<1x64xf32, #tpu.memory_space<vmem>>, vector<1x64xf32>
    %13 = vector.broadcast %12 : vector<1x64xf32> to vector<8x64xf32>
    %14 = arith.addf %11, %13 : vector<8x64xf32>
    %cst_11 = arith.constant 0.000000e+00 : f32
    %15 = vector.broadcast %cst_11 : f32 to vector<8x64xf32>
    %16 = arith.maximumf %14, %15 : vector<8x64xf32>
    %17 = arith.truncf %16 : vector<8x64xf32> to vector<8x64xbf16>
    %c0_12 = arith.constant 0 : index
    %c0_13 = arith.constant 0 : index
    %18 = vector.load %arg6[%c0_12, %c0_13] : memref<64x32xbf16, #tpu.memory_space<vmem>>, vector<64x32xbf16>
    %cst_14 = arith.constant dense<0.000000e+00> : vector<8x32xf32>
    %19 = tpu.matmul %17, %18, %cst_14 {dimension_numbers = #tpu.dot_dimension_numbers<[1], [0], [0], [1], [0, 0, 1, 1], [], []>} : vector<8x64xbf16>, vector<64x32xbf16>, vector<8x32xf32> -> vector<8x32xf32>
    %c0_15 = arith.constant 0 : index
    %c0_16 = arith.constant 0 : index
    %20 = vector.load %arg7[%c0_15, %c0_16] : memref<1x32xf32, #tpu.memory_space<vmem>>, vector<1x32xf32>
    %21 = vector.broadcast %20 : vector<1x32xf32> to vector<8x32xf32>
    %22 = arith.addf %19, %21 : vector<8x32xf32>
    %cst_17 = arith.constant 0.000000e+00 : f32
    %23 = vector.broadcast %cst_17 : f32 to vector<8x32xf32>
    %24 = arith.maximumf %22, %23 : vector<8x32xf32>
    %25 = arith.truncf %24 : vector<8x32xf32> to vector<8x32xbf16>
    %c0_18 = arith.constant 0 : index
    %c0_19 = arith.constant 0 : index
    %26 = vector.load %arg8[%c0_18, %c0_19] : memref<32x7xbf16, #tpu.memory_space<vmem>>, vector<32x7xbf16>
    %cst_20 = arith.constant dense<0.000000e+00> : vector<8x7xf32>
    %27 = tpu.matmul %25, %26, %cst_20 {dimension_numbers = #tpu.dot_dimension_numbers<[1], [0], [0], [1], [0, 0, 1, 1], [], []>} : vector<8x32xbf16>, vector<32x7xbf16>, vector<8x7xf32> -> vector<8x7xf32>
    %c0_21 = arith.constant 0 : index
    %c0_22 = arith.constant 0 : index
    %28 = vector.load %arg9[%c0_21, %c0_22] : memref<1x7xf32, #tpu.memory_space<vmem>>, vector<1x7xf32>
    %29 = vector.broadcast %28 : vector<1x7xf32> to vector<8x7xf32>
    %30 = arith.addf %27, %29 : vector<8x7xf32>
    %c0_23 = arith.constant 0 : index
    %c0_24 = arith.constant 0 : index
    %31 = vector.load %arg10[%c0_23, %c0_24] : memref<8x7xf32, #tpu.memory_space<vmem>>, vector<8x7xf32>
    tpu.vector_store %arg10[%c0_23, %c0_24], %30 {strides = array<i32>} : memref<8x7xf32, #tpu.memory_space<vmem>>, vector<8x7xf32>,
    return
  }
  func.func @transform_0(%arg0: i32) -> (i32, i32) {
    %c0_i32 = arith.constant 0 : i32
    %c0_i32_0 = arith.constant 0 : i32
    return %arg0, %c0_i32 : i32, i32
  }
  func.func @transform_1(%arg0: i32) -> (i32, i32) {
    %c0_i32 = arith.constant 0 : i32
    %c0_i32_0 = arith.constant 0 : i32
    %c0_i32_1 = arith.constant 0 : i32
    return %c0_i32, %c0_i32_0 : i32, i32
  }
  func.func @transform_2(%arg0: i32) -> (i32, i32) {
    %c0_i32 = arith.constant 0 : i32
    %c0_i32_0 = arith.constant 0 : i32
    %c0_i32_1 = arith.constant 0 : i32
    return %c0_i32, %c0_i32_0 : i32, i32
  }
  func.func @transform_3(%arg0: i32) -> (i32, i32) {
    %c0_i32 = arith.constant 0 : i32
    %c0_i32_0 = arith.constant 0 : i32
    %c0_i32_1 = arith.constant 0 : i32
    return %c0_i32, %c0_i32_0 : i32, i32
  }
  func.func @transform_4(%arg0: i32) -> (i32, i32) {
    %c0_i32 = arith.constant 0 : i32
    %c0_i32_0 = arith.constant 0 : i32
    %c0_i32_1 = arith.constant 0 : i32
    return %c0_i32, %c0_i32_0 : i32, i32
  }
  func.func @transform_5(%arg0: i32) -> (i32, i32) {
    %c0_i32 = arith.constant 0 : i32
    %c0_i32_0 = arith.constant 0 : i32
    %c0_i32_1 = arith.constant 0 : i32
    return %c0_i32, %c0_i32_0 : i32, i32
  }
  func.func @transform_6(%arg0: i32) -> (i32, i32) {
    %c0_i32 = arith.constant 0 : i32
    %c0_i32_0 = arith.constant 0 : i32
    %c0_i32_1 = arith.constant 0 : i32
    return %c0_i32, %c0_i32_0 : i32, i32
  }
  func.func @transform_7(%arg0: i32) -> (i32, i32) {
    %c0_i32 = arith.constant 0 : i32
    %c0_i32_0 = arith.constant 0 : i32
    %c0_i32_1 = arith.constant 0 : i32
    return %c0_i32, %c0_i32_0 : i32, i32
  }
  func.func @transform_8(%arg0: i32) -> (i32, i32) {
    %c0_i32 = arith.constant 0 : i32
    %c0_i32_0 = arith.constant 0 : i32
    %c0_i32_1 = arith.constant 0 : i32
    return %c0_i32, %c0_i32_0 : i32, i32
  }
  func.func @transform_9(%arg0: i32) -> (i32, i32) {
    %c0_i32 = arith.constant 0 : i32
    %c0_i32_0 = arith.constant 0 : i32
    return %arg0, %c0_i32 : i32, i32
  }
}

</mosaic_0001>

<llo_original>
// kernel: classifier_forward.1
$region0: #{classifier_forward.1}
  #allocation0 [shape = 'u32[]', space=smem, size = 0x4, offset = 0x4, fixed_abs, tag = 'smem constant byte address 0x4 - core index']
  #allocation1 [shape = 'u32[144,128]{1,0:T(1,128)}', space=vmem, size = 0x12000, scoped, tag = 'internal scratch']
  %s0 = inlined_call_operand.vmem [shape: f32[8,27], index: 0, kind: input, shape index: {}]
  %s1 = inlined_call_operand.vmem [shape: bf16[27,128], index: 1, kind: input, shape index: {}]
  %s2 = inlined_call_operand.vmem [shape: f32[1,128], index: 2, kind: input, shape index: {}]
  %s3 = inlined_call_operand.vmem [shape: bf16[128,64], index: 3, kind: input, shape index: {}]
  %s4 = inlined_call_operand.vmem [shape: f32[1,64], index: 4, kind: input, shape index: {}]
  %s5 = inlined_call_operand.vmem [shape: bf16[64,32], index: 5, kind: input, shape index: {}]
  %s6 = inlined_call_operand.vmem [shape: f32[1,32], index: 6, kind: input, shape index: {}]
  %s7 = inlined_call_operand.vmem [shape: bf16[32,7], index: 7, kind: input, shape index: {}]
  %s8 = inlined_call_operand.vmem [shape: f32[1,7], index: 8, kind: input, shape index: {}]
  %s9 = inlined_call_operand.hbm [shape: f32[8,7], index: 9, kind: output, shape index: {}]
  %s10 = sld [smem:[#allocation0]]
  $region46: #{classifier_forward.1} parent=0
    _
  %s12 = ssub.s32 1, %s10
  %s13 = scalar_select 0, %s12, %s10
  $region1: #{classifier_forward.1} parent=0
    #allocation2 [shape = 'u8[4096]{0}', space=vmem, size = 0x1000, scoped, tag = 'output window, operand 0, single buffered']
    #allocation3 [shape = 's32[1]{0}', space=sflag, size = 0x4, scoped, tag = 'scoped memory for classifier_forward.1']
    %14 = vsyncpa [#allocation3], 0
    // Predicated region
    $region2: #{classifier_forward.1} parent=1 // pred_check
      _
    $region3: #{classifier_forward.1} parent=1 // pred_check_branch
      %16 = sbr.rel (0) target = $region5
    $region4: #{classifier_forward.1} parent=1 // pred_region
      _
    $region5: #{classifier_forward.1} parent=1 // pred_fallthru
      _
    // Predicated region
    $region6: #{classifier_forward.1} parent=1 // pred_check
      _
    $region7: #{classifier_forward.1} parent=1 // pred_check_branch
      %18 = sbr.rel (0) target = $region9
    $region8: #{classifier_forward.1} parent=1 // pred_region
      _
    $region9: #{classifier_forward.1} parent=1 // pred_fallthru
      _
    // Predicated region
    $region10: #{classifier_forward.1} parent=1 // pred_check
      _
    $region11: #{classifier_forward.1} parent=1 // pred_check_branch
      %20 = sbr.rel (0) target = $region13
    $region12: #{classifier_forward.1} parent=1 // pred_region
      _
    $region13: #{classifier_forward.1} parent=1 // pred_fallthru
      _
    // Predicated region
    $region14: #{classifier_forward.1} parent=1 // pred_check
      _
    $region15: #{classifier_forward.1} parent=1 // pred_check_branch
      %22 = sbr.rel (0) target = $region17
    $region16: #{classifier_forward.1} parent=1 // pred_region
      _
    $region17: #{classifier_forward.1} parent=1 // pred_fallthru
      _
    // Predicated region
    $region18: #{classifier_forward.1} parent=1 // pred_check
      _
    $region19: #{classifier_forward.1} parent=1 // pred_check_branch
      %24 = sbr.rel (0) target = $region21
    $region20: #{classifier_forward.1} parent=1 // pred_region
      _
    $region21: #{classifier_forward.1} parent=1 // pred_fallthru
      _
    // Predicated region
    $region22: #{classifier_forward.1} parent=1 // pred_check
      _
    $region23: #{classifier_forward.1} parent=1 // pred_check_branch
      %26 = sbr.rel (0) target = $region25
    $region24: #{classifier_forward.1} parent=1 // pred_region
      _
    $region25: #{classifier_forward.1} parent=1 // pred_fallthru
      _
    // Predicated region
    $region26: #{classifier_forward.1} parent=1 // pred_check
      _
    $region27: #{classifier_forward.1} parent=1 // pred_check_branch
      %28 = sbr.rel (0) target = $region29
    $region28: #{classifier_forward.1} parent=1 // pred_region
      _
    $region29: #{classifier_forward.1} parent=1 // pred_fallthru
      _
    // Predicated region
    $region30: #{classifier_forward.1} parent=1 // pred_check
      _
    $region31: #{classifier_forward.1} parent=1 // pred_check_branch
      %30 = sbr.rel (0) target = $region33
    $region32: #{classifier_forward.1} parent=1 // pred_region
      _
    $region33: #{classifier_forward.1} parent=1 // pred_fallthru
      _
    // Predicated region
    $region34: #{classifier_forward.1} parent=1 // pred_check
      _
    $region35: #{classifier_forward.1} parent=1 // pred_check_branch
      %32 = sbr.rel (0) target = $region37
    $region36: #{classifier_forward.1} parent=1 // pred_region
      _
    $region37: #{classifier_forward.1} parent=1 // pred_fallthru
      _
    %v34 = vld [vmem:[%s0] sm:$0xff]
    %v35 = vpack.c.bf16 %v34, %v34
    %v36 = vld [vmem:[%s1] sm:$0xf]
    %v37 = vld [vmem:[%s1 + $0x4] sm:$0xf]
    %v38 = vld [vmem:[%s1 + $0x8] sm:$0xf]
    %v39 = vld [vmem:[%s1 + $0xc] sm:$0x3]
    %v40 = vld [vmem:[%s2] sm:$0x1]
    %v42 = vlaneseq
    %v43 = vshrl.u32 %v42, 7
    %v44 = vsub.s32 0, %v43
    %v45 = vrot.slane %v40, %v44
    %v51 = vunpack.c.l.b16 %v36
    %v52 = vunpack.c.l.b16 %v37
    %v53 = vunpack.c.l.b16 %v38
    %v54 = vunpack.c.l.b16 %v39
    %v55 = vpack.c.b16 %v52, %v51
    %v56 = vpack.c.b16 %v54, %v53
    %vm58 = vcmask 220160
    %v60 = vsel %vm58, %v35, 0
    %vm62 = vcmask 1044480
    %vm63 = vcmask 1045504
    %v64 = vsel %vm62, 4294967295, 65535
    %v65 = vsel %vm63, %v64, 0
    %v67 = vand.u32 %v56, %v65
    %69 = vmatprep.subr.bf16.mxu0 0
    %70 = vmatpush1.bf16.msra.mxu0 %v55
    %71 = vmatprep.subr.bf16.mxu0 0
    %72 = vmatpush1.bf16.msra.mxu0 %v67
    %73 = vmatprep.subr.bf16.mxu0 0
    %74 = vmatpush1.bf16.msra.mxu0 0
    %75 = vmatprep.subr.bf16.mxu0 0
    %76 = vmatpush1.bf16.msra.mxu0 0
    %77 = vmatprep.subr.bf16.mxu0 0
    %78 = vmatpush1.bf16.msra.mxu0 0
    %79 = vmatprep.subr.bf16.mxu0 0
    %80 = vmatpush1.bf16.msra.mxu0 0
    %81 = vmatprep.subr.bf16.mxu0 0
    %82 = vmatpush1.bf16.msra.mxu0 0
    %83 = vmatprep.subr.bf16.mxu0 0
    %84 = vmatpush1.bf16.msra.mxu0 0
    %85 = vmatprep.subr.bf16.mxu0 0
    %86 = vmatpush1.bf16.msra.mxu0 0
    %87 = vmatprep.subr.bf16.mxu0 0
    %88 = vmatpush1.bf16.msra.mxu0 0
    %89 = vmatprep.subr.bf16.mxu0 0
    %90 = vmatpush1.bf16.msra.mxu0 0
    %91 = vmatprep.subr.bf16.mxu0 0
    %92 = vmatpush1.bf16.msra.mxu0 0
    %93 = vmatprep.subr.bf16.mxu0 0
    %94 = vmatpush1.bf16.msra.mxu0 0
    %95 = vmatprep.subr.bf16.mxu0 0
    %96 = vmatpush1.bf16.msra.mxu0 0
    %97 = vmatprep.subr.bf16.mxu0 0
    %98 = vmatpush1.bf16.msra.mxu0 0
    %99 = vmatprep.subr.bf16.mxu0 0
    %100 = vmatpush1.bf16.msra.mxu0 0
    %101 = vmatprep.mubr.bf16.mxu0 0
    %102 = vmatmul.mubr.bf16.gmra.mrb[0].mxu0 %v60
    %v103 = vpop.f32.mrb[0].mxu0
    %v104 = vadd.f32 %v45, %v103
    %v105 = vpop.f32.mrb[0].mxu0
    %v106 = vpop.f32.mrb[0].mxu0
    %v107 = vpop.f32.mrb[0].mxu0
    %108 = vdwg.mxu0
    %v109 = vmax.f32 %v104, 0.0
    %v110 = vpack.c.bf16 %v109, %v109
    %v111 = vld [vmem:[%s3] sm:$0xf]
    %v112 = vld [vmem:[%s3 + $0x4] sm:$0xf]
    %v113 = vld [vmem:[%s3 + $0x8] sm:$0xf]
    %v114 = vld [vmem:[%s3 + $0xc] sm:$0xf]
    %v115 = vld [vmem:[%s3 + $0x10] sm:$0xf]
    %v116 = vld [vmem:[%s3 + $0x14] sm:$0xf]
    %v117 = vld [vmem:[%s3 + $0x18] sm:$0xf]
    %v118 = vld [vmem:[%s3 + $0x1c] sm:$0xf]
    %v119 = vld [vmem:[%s3 + $0x20] sm:$0xf]
    %v120 = vld [vmem:[%s3 + $0x24] sm:$0xf]
    %v121 = vld [vmem:[%s3 + $0x28] sm:$0xf]
    %v122 = vld [vmem:[%s3 + $0x2c] sm:$0xf]
    %v123 = vld [vmem:[%s3 + $0x30] sm:$0xf]
    %v124 = vld [vmem:[%s3 + $0x34] sm:$0xf]
    %v125 = vld [vmem:[%s3 + $0x38] sm:$0xf]
    %v126 = vld [vmem:[%s3 + $0x3c] sm:$0xf]
    %v127 = vld [vmem:[%s4] sm:$0x1]
    %v129 = vlaneseq
    %v130 = vshrl.u32 %v129, 7
    %v131 = vsub.s32 0, %v130
    %v132 = vrot.slane %v127, %v131
    %v150 = vunpack.c.l.b16 %v111
    %v151 = vunpack.c.l.b16 %v112
    %v152 = vunpack.c.l.b16 %v113
    %v153 = vunpack.c.l.b16 %v114
    %v154 = vunpack.c.l.b16 %v115
    %v155 = vunpack.c.l.b16 %v116
    %v156 = vunpack.c.l.b16 %v117
    %v157 = vunpack.c.l.b16 %v118
    %v158 = vunpack.c.l.b16 %v119
    %v159 = vunpack.c.l.b16 %v120
    %v160 = vunpack.c.l.b16 %v121
    %v161 = vunpack.c.l.b16 %v122
    %v162 = vunpack.c.l.b16 %v123
    %v163 = vunpack.c.l.b16 %v124
    %v164 = vunpack.c.l.b16 %v125
    %v165 = vunpack.c.l.b16 %v126
    %v166 = vpack.c.b16 %v151, %v150
    %v167 = vpack.c.b16 %v153, %v152
    %v168 = vpack.c.b16 %v155, %v154
    %v169 = vpack.c.b16 %v157, %v156
    %v170 = vpack.c.b16 %v159, %v158
    %v171 = vpack.c.b16 %v161, %v160
    %v172 = vpack.c.b16 %v163, %v162
    %v173 = vpack.c.b16 %v165, %v164
    %182 = vmatprep.subr.bf16.mxu0 0
    %183 = vmatpush1.bf16.msra.mxu0 %v166
    %184 = vmatprep.subr.bf16.mxu0 0
    %185 = vmatpush1.bf16.msra.mxu0 %v167
    %186 = vmatprep.subr.bf16.mxu0 0
    %187 = vmatpush1.bf16.msra.mxu0 %v168
    %188 = vmatprep.subr.bf16.mxu0 0
    %189 = vmatpush1.bf16.msra.mxu0 %v169
    %190 = vmatprep.subr.bf16.mxu0 0
    %191 = vmatpush1.bf16.msra.mxu0 %v170
    %192 = vmatprep.subr.bf16.mxu0 0
    %193 = vmatpush1.bf16.msra.mxu0 %v171
    %194 = vmatprep.subr.bf16.mxu0 0
    %195 = vmatpush1.bf16.msra.mxu0 %v172
    %196 = vmatprep.subr.bf16.mxu0 0
    %197 = vmatpush1.bf16.msra.mxu0 %v173
    %198 = vmatprep.subr.bf16.mxu0 0
    %199 = vmatpush1.bf16.msra.mxu0 0
    %200 = vmatprep.subr.bf16.mxu0 0
    %201 = vmatpush1.bf16.msra.mxu0 0
    %202 = vmatprep.subr.bf16.mxu0 0
    %203 = vmatpush1.bf16.msra.mxu0 0
    %204 = vmatprep.subr.bf16.mxu0 0
    %205 = vmatpush1.bf16.msra.mxu0 0
    %206 = vmatprep.subr.bf16.mxu0 0
    %207 = vmatpush1.bf16.msra.mxu0 0
    %208 = vmatprep.subr.bf16.mxu0 0
    %209 = vmatpush1.bf16.msra.mxu0 0
    %210 = vmatprep.subr.bf16.mxu0 0
    %211 = vmatpush1.bf16.msra.mxu0 0
    %212 = vmatprep.subr.bf16.mxu0 0
    %213 = vmatpush1.bf16.msra.mxu0 0
    %214 = vmatprep.mubr.bf16.mxu0 0
    %215 = vmatmul.mubr.bf16.gmra.mrb[0].mxu0 %v110
    %v216 = vpop.f32.mrb[0].mxu0
    %v217 = vadd.f32 %v132, %v216
    %v218 = vpop.f32.mrb[0].mxu0
    %v219 = vpop.f32.mrb[0].mxu0
    %v220 = vpop.f32.mrb[0].mxu0
    %221 = vdwg.mxu0
    %v222 = vmax.f32 %v217, 0.0
    %v223 = vpack.c.bf16 %v222, %v222
    %v224 = vld [vmem:[%s5] sm:$0xf]
    %v225 = vld [vmem:[%s5 + $0x4] sm:$0xf]
    %v226 = vld [vmem:[%s5 + $0x8] sm:$0xf]
    %v227 = vld [vmem:[%s5 + $0xc] sm:$0xf]
    %v228 = vld [vmem:[%s5 + $0x10] sm:$0xf]
    %v229 = vld [vmem:[%s5 + $0x14] sm:$0xf]
    %v230 = vld [vmem:[%s5 + $0x18] sm:$0xf]
    %v231 = vld [vmem:[%s5 + $0x1c] sm:$0xf]
    %v232 = vld [vmem:[%s6] sm:$0x1]
    %v234 = vlaneseq
    %v235 = vshrl.u32 %v234, 7
    %v236 = vsub.s32 0, %v235
    %v237 = vrot.slane %v232, %v236
    %v247 = vunpack.c.l.b16 %v224
    %v248 = vunpack.c.l.b16 %v225
    %v249 = vunpack.c.l.b16 %v226
    %v250 = vunpack.c.l.b16 %v227
    %v251 = vunpack.c.l.b16 %v228
    %v252 = vunpack.c.l.b16 %v229
    %v253 = vunpack.c.l.b16 %v230
    %v254 = vunpack.c.l.b16 %v231
    %v255 = vpack.c.b16 %v248, %v247
    %v256 = vpack.c.b16 %v250, %v249
    %v257 = vpack.c.b16 %v252, %v251
    %v258 = vpack.c.b16 %v254, %v253
    %vm263 = vcmask 523264
    %v265 = vsel %vm263, %v223, 0
    %267 = vmatprep.subr.bf16.mxu0 0
    %268 = vmatpush1.bf16.msra.mxu0 %v255
    %269 = vmatprep.subr.bf16.mxu0 0
    %270 = vmatpush1.bf16.msra.mxu0 %v256
    %271 = vmatprep.subr.bf16.mxu0 0
    %272 = vmatpush1.bf16.msra.mxu0 %v257
    %273 = vmatprep.subr.bf16.mxu0 0
    %274 = vmatpush1.bf16.msra.mxu0 %v258
    %275 = vmatprep.subr.bf16.mxu0 0
    %276 = vmatpush1.bf16.msra.mxu0 0
    %277 = vmatprep.subr.bf16.mxu0 0
    %278 = vmatpush1.bf16.msra.mxu0 0
    %279 = vmatprep.subr.bf16.mxu0 0
    %280 = vmatpush1.bf16.msra.mxu0 0
    %281 = vmatprep.subr.bf16.mxu0 0
    %282 = vmatpush1.bf16.msra.mxu0 0
    %283 = vmatprep.subr.bf16.mxu0 0
    %284 = vmatpush1.bf16.msra.mxu0 0
    %285 = vmatprep.subr.bf16.mxu0 0
    %286 = vmatpush1.bf16.msra.mxu0 0
    %287 = vmatprep.subr.bf16.mxu0 0
    %288 = vmatpush1.bf16.msra.mxu0 0
    %289 = vmatprep.subr.bf16.mxu0 0
    %290 = vmatpush1.bf16.msra.mxu0 0
    %291 = vmatprep.subr.bf16.mxu0 0
    %292 = vmatpush1.bf16.msra.mxu0 0
    %293 = vmatprep.subr.bf16.mxu0 0
    %294 = vmatpush1.bf16.msra.mxu0 0
    %295 = vmatprep.subr.bf16.mxu0 0
    %296 = vmatpush1.bf16.msra.mxu0 0
    %297 = vmatprep.subr.bf16.mxu0 0
    %298 = vmatpush1.bf16.msra.mxu0 0
    %299 = vmatprep.mubr.bf16.mxu0 0
    %300 = vmatmul.mubr.bf16.gmra.mrb[0].mxu0 %v265
    %v301 = vpop.f32.mrb[0].mxu0
    %v302 = vadd.f32 %v237, %v301
    %v303 = vpop.f32.mrb[0].mxu0
    %v304 = vpop.f32.mrb[0].mxu0
    %v305 = vpop.f32.mrb[0].mxu0
    %306 = vdwg.mxu0
    %v307 = vmax.f32 %v302, 0.0
    %v308 = vpack.c.bf16 %v307, %v307
    %v309 = vld [vmem:[%s7] sm:$0xf]
    %v310 = vld [vmem:[%s7 + $0x4] sm:$0xf]
    %v311 = vld [vmem:[%s7 + $0x8] sm:$0xf]
    %v312 = vld [vmem:[%s7 + $0xc] sm:$0xf]
    %v313 = vld [vmem:[%s8] sm:$0x1]
    %v315 = vlaneseq
    %v316 = vshrl.u32 %v315, 7
    %v317 = vsub.s32 0, %v316
    %v318 = vrot.slane %v313, %v317
    %v324 = vunpack.c.l.b16 %v309
    %v325 = vunpack.c.l.b16 %v310
    %v326 = vunpack.c.l.b16 %v311
    %v327 = vunpack.c.l.b16 %v312
    %v328 = vpack.c.b16 %v325, %v324
    %v329 = vpack.c.b16 %v327, %v326
    %vm332 = vcmask 261120
    %v334 = vsel %vm332, %v308, 0
    %336 = vmatprep.subr.bf16.mxu0 0
    %337 = vmatpush1.bf16.msra.mxu0 %v328
    %338 = vmatprep.subr.bf16.mxu0 0
    %339 = vmatpush1.bf16.msra.mxu0 %v329
    %340 = vmatprep.subr.bf16.mxu0 0
    %341 = vmatpush1.bf16.msra.mxu0 0
    %342 = vmatprep.subr.bf16.mxu0 0
    %343 = vmatpush1.bf16.msra.mxu0 0
    %344 = vmatprep.subr.bf16.mxu0 0
    %345 = vmatpush1.bf16.msra.mxu0 0
    %346 = vmatprep.subr.bf16.mxu0 0
    %347 = vmatpush1.bf16.msra.mxu0 0
    %348 = vmatprep.subr.bf16.mxu0 0
    %349 = vmatpush1.bf16.msra.mxu0 0
    %350 = vmatprep.subr.bf16.mxu0 0
    %351 = vmatpush1.bf16.msra.mxu0 0
    %352 = vmatprep.subr.bf16.mxu0 0
    %353 = vmatpush1.bf16.msra.mxu0 0
    %354 = vmatprep.subr.bf16.mxu0 0
    %355 = vmatpush1.bf16.msra.mxu0 0
    %356 = vmatprep.subr.bf16.mxu0 0
    %357 = vmatpush1.bf16.msra.mxu0 0
    %358 = vmatprep.subr.bf16.mxu0 0
    %359 = vmatpush1.bf16.msra.mxu0 0
    %360 = vmatprep.subr.bf16.mxu0 0
    %361 = vmatpush1.bf16.msra.mxu0 0
    %362 = vmatprep.subr.bf16.mxu0 0
    %363 = vmatpush1.bf16.msra.mxu0 0
    %364 = vmatprep.subr.bf16.mxu0 0
    %365 = vmatpush1.bf16.msra.mxu0 0
    %366 = vmatprep.subr.bf16.mxu0 0
    %367 = vmatpush1.bf16.msra.mxu0 0
    %368 = vmatprep.mubr.bf16.mxu0 0
    %369 = vmatmul.mubr.bf16.gmra.mrb[0].mxu0 %v334
    %v370 = vpop.f32.mrb[0].mxu0
    %v371 = vadd.f32 %v318, %v370
    %v372 = vpop.f32.mrb[0].mxu0
    %v373 = vpop.f32.mrb[0].mxu0
    %v374 = vpop.f32.mrb[0].mxu0
    %375 = vdwg.mxu0
    %vm376 = vcmask 56320
    %377 = vst.msk [vmem:[#allocation2] sm:$0xff] %vm376, %v371
    // Predicated region
    $region38: #{classifier_forward.1} parent=1 // pred_check
      _
    $region39: #{classifier_forward.1} parent=1 // pred_check_branch
      %379 = sbr.rel (0) target = $region41
    $region40: #{classifier_forward.1} parent=1 // pred_region
      %s381 = ssub.s32 128, 128
      %382 = vsyncadd [#allocation3], %s381
      %s384 = sshll.u32 [#allocation2], 4
      %s385 = int_to_ptr.vmem [resolvable:$true] %s384
      %387 = dma.vmem_to_hbm [thread:$0]  %s385, 128, %s9, [#allocation3]
    $region41: #{classifier_forward.1} parent=1 // pred_fallthru
      _
    // Predicated region
    $region42: #{classifier_forward.1} parent=1 // pred_check
      _
    $region43: #{classifier_forward.1} parent=1 // pred_check_branch
      %389 = sbr.rel (0) target = $region45
    $region44: #{classifier_forward.1} parent=1 // pred_region
      %390 = dma.done [#allocation3], 128
    $region45: #{classifier_forward.1} parent=1 // pred_fallthru
      _
    %391 = vsyncpa [#allocation3], 1

</llo_original>
